<compile_context>
chip_gen: v5e
topology: v5e:2x2
jax: 0.10.0
libtpu: 0.0.40
codegen_flags: <defaults>
</compile_context>

<pallas_src>
import numpy as np
import jax
import jax.numpy as jnp
from jax.experimental import pallas as pl
from jax.experimental.pallas import tpu as pltpu

EPS = 1e-5
P_PAD = 8            # coordinate channels padded 3 -> 8 for lane-friendly matmuls
TILE_PRE_MAX = 1024  # row tile cap for the projection kernel (tiny per-row working set)


# ------------------------------- helpers ------------------------------------

def _round_up(a, b):
    return (a + b - 1) // b * b


def _pad_rows(a, n_to):
    pad = n_to - a.shape[0]
    if pad == 0:
        return a
    return jnp.pad(a, ((0, pad),) + ((0, 0),) * (a.ndim - 1))


def _fit_rows(a, n_to):
    if a.shape[0] == n_to:
        return a
    if a.shape[0] > n_to:
        return a[:n_to]
    return _pad_rows(a, n_to)


def _chip_vmem_bytes():
    try:
        return int(pltpu.get_tpu_info().vmem_capacity_bytes)
    except Exception:
        return 64 * 1024 * 1024      # conservative default (v7x per-TC VMEM)


def _pick_tile(n, max_tile):
    """Row tile: multiple of 16 (bf16 sublane packing), capped, >=2 grid steps if possible."""
    base = _round_up(n, 16)
    t = min(max_tile, base)
    if base >= 32 and _round_up(n, t) // t < 2:
        t = _round_up(base // 2, 16)   # give v7x megacore at least 2 parallel grid steps
    return t


# ----------------------------- Pallas kernels -------------------------------

def _pre_kernel(x_ref, wtd_ref, btd_ref, w1_ref, b1_ref, wq_ref, bq_ref,
                wkv_ref, bkv_ref, qx0_ref, kv_ref):
    C = wq_ref.shape[1]
    x = x_ref[...]
    # TransitionDown (stride=1): Linear(no bias) + folded BN + ReLU
    x0 = jnp.maximum(
        jnp.dot(x, wtd_ref[...], preferred_element_type=jnp.float32) + btd_ref[...], 0.0)
    # linear1 + folded bn1 + ReLU
    x1 = jnp.maximum(
        jnp.dot(x0, w1_ref[...], preferred_element_type=jnp.float32) + b1_ref[...], 0.0)
    # Lane-dense fused f32 output slab [x0 | q] (residual identity + per-row query).
    qx0_ref[:, :C] = x0
    qx0_ref[:, C:] = (jnp.dot(x1, wq_ref[...], preferred_element_type=jnp.float32)
                      + bq_ref[...])
    # Lane-dense fused bf16 output slab [k | v]: gathered later, streamed as bf16.
    kv = jnp.dot(x1, wkv_ref[...], preferred_element_type=jnp.float32) + bkv_ref[...]
    kv_ref[...] = kv.astype(kv_ref.dtype)


def _attn_kernel(qx0_ref, kv_ref, pr_ref,
                 wp1_ref, bp1_ref, wp2_ref, bp2_ref,
                 sw0_ref, hw0_ref, ww1_ref, bw1_ref, ww2_ref, bw2_ref,
                 selk_ref, selv_ref, exp_ref, s2_ref, h2_ref, w3_ref, b3_ref,
                 out_ref):
    TN, K, C2 = kv_ref.shape
    C = C2 // 2
    P = pr_ref.shape[2]
    Cs = ww1_ref.shape[1]

    # linear_p: Linear(3,3)+BN(3) folded -> ReLU -> Linear(3, C) on relative coords.
    pr = pr_ref[...].astype(jnp.float32).reshape(TN * K, P)
    h = jnp.maximum(
        jnp.dot(pr, wp1_ref[...], preferred_element_type=jnp.float32) + bp1_ref[...], 0.0)
    p_r = jnp.dot(h, wp2_ref[...], preferred_element_type=jnp.float32) + bp2_ref[...]
    p_r3 = p_r.reshape(TN, K, C)

    # Split the fused lane-dense [k | v] neighbour block with two exact 0/1 selection
    # matmuls (bf16 x bf16 -> f32) on the otherwise idle MXU; avoids a sub-vreg column
    # slice / relayout of the dominant (TN*K, 2C) tensor and keeps the DMA lane-dense.
    kv = kv_ref[...].reshape(TN * K, C2)
    xk = jnp.dot(kv, selk_ref[...], preferred_element_type=jnp.float32).reshape(TN, K, C)
    xv = jnp.dot(kv, selv_ref[...], preferred_element_type=jnp.float32).reshape(TN, K, C)

    qx0 = qx0_ref[...]
    xq = qx0[:, C:]                                       # (TN, C) f32

    # w = x_k - x_q + p_r   (out_planes // mid_planes == 1 -> the .sum(2) is identity)
    w = (xk - xq[:, None, :] + p_r3).reshape(TN * K, C)

    # linear_w: BN(C) -> ReLU -> [Linear(C,Cs)+BN(Cs) folded] -> ReLU -> Linear(Cs,Cs)
    w = jnp.maximum(w * sw0_ref[...] + hw0_ref[...], 0.0)
    w = jnp.maximum(
        jnp.dot(w, ww1_ref[...], preferred_element_type=jnp.float32) + bw1_ref[...], 0.0)
    w = jnp.dot(w, ww2_ref[...], preferred_element_type=jnp.float32) + bw2_ref[...]
    w3d = w.reshape(TN, K, Cs)

    # softmax over the neighbour axis; reciprocal goes to the (idle) EUP slot
    m = jnp.max(w3d, axis=1, keepdims=True)
    e = jnp.exp(w3d - m)
    attn = e * pl.reciprocal(jnp.sum(e, axis=1, keepdims=True), approx=True)  # (TN,K,Cs)

    # Share-group broadcast of attn to all C channels via a tiny MXU matmul
    # (exp_ref[c, j] = 1 iff j % Cs == c); avoids the [attn]*s lane-shuffle concat.
    attn_full = jnp.dot(attn.reshape(TN * K, Cs), exp_ref[...],
                        preferred_element_type=jnp.float32).reshape(TN, K, C)
    y = jnp.sum((xv + p_r3) * attn_full, axis=1)          # (TN, C)

    # bn2 + ReLU, linear3 + folded bn3, residual add (identity = x0), final ReLU
    x2 = jnp.maximum(y * s2_ref[...] + h2_ref[...], 0.0)
    x3 = jnp.dot(x2, w3_ref[...], preferred_element_type=jnp.float32) + b3_ref[...]
    out_ref[...] = jnp.maximum(x3 + qx0[:, :C], 0.0)


# --------------------------- pallas_call wrappers ----------------------------

def pre_project(x, kp, *, tile_n, vmem_limit):
    N, Cin = x.shape
    C = kp["wq"].shape[1]
    grid = (N // tile_n,)
    row_in = pl.BlockSpec((tile_n, Cin), lambda i: (i, 0))
    row_out = pl.BlockSpec((tile_n, 2 * C), lambda i: (i, 0))

    def full(shape):
        return pl.BlockSpec(shape, lambda i: (0, 0))

    return pl.pallas_call(
        _pre_kernel,
        out_shape=(jax.ShapeDtypeStruct((N, 2 * C), jnp.float32),
                   jax.ShapeDtypeStruct((N, 2 * C), jnp.bfloat16)),
        grid=grid,
        in_specs=[row_in,
                  full((Cin, C)), full((1, C)),
                  full((C, C)), full((1, C)),
                  full((C, C)), full((1, C)),
                  full((C, 2 * C)), full((1, 2 * C))],
        out_specs=(row_out, row_out),
        compiler_params=pltpu.CompilerParams(
            dimension_semantics=("parallel",),
            vmem_limit_bytes=vmem_limit),
    )(x, kp["wtd"], kp["btd"], kp["w1"], kp["b1"], kp["wq"], kp["bq"],
      kp["wkv"], kp["bkv"])


def attn_block(qx0, kv_g, pr_g, kp, *, tile_n, vmem_limit):
    N, K, C2 = kv_g.shape
    C = C2 // 2
    P = pr_g.shape[2]
    Cs = kp["ww1"].shape[1]
    grid = (N // tile_n,)

    def full(shape):
        return pl.BlockSpec(shape, lambda i: (0, 0))

    in_specs = [
        pl.BlockSpec((tile_n, 2 * C), lambda i: (i, 0)),
        pl.BlockSpec((tile_n, K, C2), lambda i: (i, 0, 0)),
        pl.BlockSpec((tile_n, K, P), lambda i: (i, 0, 0)),
        full((P, P)), full((1, P)), full((P, C)), full((1, C)),
        full((1, C)), full((1, C)), full((C, Cs)), full((1, Cs)),
        full((Cs, Cs)), full((1, Cs)),
        full((C2, C)), full((C2, C)), full((Cs, C)),
        full((1, C)), full((1, C)), full((C, C)), full((1, C)),
    ]
    return pl.pallas_call(
        _attn_kernel,
        out_shape=jax.ShapeDtypeStruct((N, C), jnp.float32),
        grid=grid,
        in_specs=in_specs,
        out_specs=pl.BlockSpec((tile_n, C), lambda i: (i, 0)),
        compiler_params=pltpu.CompilerParams(
            dimension_semantics=("parallel",),
            vmem_limit_bytes=vmem_limit),
    )(qx0, kv_g, pr_g,
      kp["wp1"], kp["bp1"], kp["wp2"], kp["bp2"],
      kp["sw0"], kp["hw0"], kp["ww1"], kp["bw1"], kp["ww2"], kp["bw2"],
      kp["selk"], kp["selv"], kp["expand"], kp["s2"], kp["h2"], kp["w3"], kp["b3"])


# ------------------------------ glue (plain JAX) -----------------------------

def knn_indices(p, o, nsample):
    """pointops.knnquery equivalent: per-segment nsample nearest neighbours.
    O(N^2) brute force - fine at demo scale, would dominate at realistic N."""
    n = p.shape[0]
    seg = jnp.sum(jnp.arange(n)[:, None] >= o[None, :], axis=1)
    d2 = jnp.sum((p[:, None, :] - p[None, :, :]) ** 2, axis=-1)
    d2 = jnp.where(seg[:, None] != seg[None, :], jnp.inf, d2)
    _, idx = jax.lax.top_k(-d2, nsample)
    return idx


def fold_bn(gamma, beta, mean, var):
    scale = gamma / jnp.sqrt(var + EPS)
    shift = beta - mean * scale
    return scale, shift


def make_kernel_params(tp):
    """Transpose Linear weights, fold every Linear->BN pair, pad coords 3 -> P_PAD,
    build the fused k|v projection, selection and share-group broadcast matrices."""
    C = tp["wp2"].shape[0]
    Cs = tp["ww1"].shape[0]
    s = C // Cs
    P = P_PAD
    kp = {}

    # TransitionDown / linear1 / linear3: no-bias Linear followed directly by BN -> fold.
    sc, sh = fold_bn(*tp["bntd"])
    kp["wtd"], kp["btd"] = tp["wtd"].T * sc[None, :], sh[None, :]
    sc, sh = fold_bn(*tp["bn1"])
    kp["w1"], kp["b1"] = tp["w1"].T * sc[None, :], sh[None, :]
    sc, sh = fold_bn(*tp["bn3"])
    kp["w3"], kp["b3"] = tp["w3"].T * sc[None, :], sh[None, :]

    # q projection and fused k|v projection (lane-dense 2C output).
    kp["wq"], kp["bq"] = tp["wq"].T, tp["bq"][None, :]
    kp["wkv"] = jnp.concatenate([tp["wk"].T, tp["wv"].T], axis=1)
    kp["bkv"] = jnp.concatenate([tp["bk"], tp["bv"]])[None, :]

    # linear_p: fold BN(3) into the first Linear; pad coord dims 3 -> P_PAD.
    sp, hp = fold_bn(*tp["bnp"])
    wp1f = tp["wp1"].T * sp[None, :]
    bp1f = tp["bp1"] * sp + hp
    kp["wp1"] = jnp.zeros((P, P), jnp.float32).at[:3, :3].set(wp1f)
    kp["bp1"] = jnp.zeros((1, P), jnp.float32).at[0, :3].set(bp1f)
    kp["wp2"] = jnp.zeros((P, C), jnp.float32).at[:3, :].set(tp["wp2"].T)
    kp["bp2"] = tp["bp2"][None, :]

    # linear_w: leading BN stays as scale/shift (ReLU precedes ww1); fold BN(Cs) into ww1.
    sw0, hw0 = fold_bn(*tp["bnw0"])
    kp["sw0"], kp["hw0"] = sw0[None, :], hw0[None, :]
    sw1, hw1 = fold_bn(*tp["bnw1"])
    kp["ww1"] = tp["ww1"].T * sw1[None, :]
    kp["bw1"] = (tp["bw1"] * sw1 + hw1)[None, :]
    kp["ww2"], kp["bw2"] = tp["ww2"].T, tp["bw2"][None, :]

    # bn2 follows the (non-linear) aggregation -> keep as scale/shift.
    s2, h2 = fold_bn(*tp["bn2"])
    kp["s2"], kp["h2"] = s2[None, :], h2[None, :]

    # Share-group broadcast matrix: (attn @ expand)[:, j] == attn[:, j % Cs].
    kp["expand"] = jnp.tile(jnp.eye(Cs, dtype=jnp.float32), (1, s))

    # Exact 0/1 selection matrices splitting the fused [k | v] block on the MXU.
    eye_c = jnp.eye(C, dtype=jnp.float32)
    zero_c = jnp.zeros((C, C), jnp.float32)
    kp["selk"] = jnp.concatenate([eye_c, zero_c], axis=0).astype(jnp.bfloat16)
    kp["selv"] = jnp.concatenate([zero_c, eye_c], axis=0).astype(jnp.bfloat16)
    return kp


def point_transformer_block_forward(p, x, o, kp, nsample,
                                    tile_pre_max=TILE_PRE_MAX, tile_attn_max=None):
    N = x.shape[0]
    cap = _chip_vmem_bytes()
    big_vmem = cap >= 100 * 1024 * 1024          # v5e / v6e (128 MiB) vs v7x (64 MiB/TC)
    vmem_limit = int(cap * (0.7 if big_vmem else 0.6))
    if tile_attn_max is None:
        tile_attn_max = 512 if big_vmem else 256

    # Kernel 1: TransitionDown + linear1 + q / fused k|v projection (ragged N padded).
    ta = _pick_tile(N, tile_pre_max)
    Na = _round_up(N, ta)
    qx0, kv = pre_project(_pad_rows(x, Na), kp, tile_n=ta, vmem_limit=vmem_limit)

    # Glue: KNN neighbour search + gather (pointops.queryandgroup).  The idx array is
    # padded to the attention tile BEFORE gathering, so the (Nb, K, *) bf16 tensors are
    # produced at their final size (no extra pad/cast passes over the dominant data).
    # Padded idx rows are 0 -> in-bounds; their garbage rows are sliced off at the end.
    tb = _pick_tile(N, tile_attn_max)
    Nb = _round_up(N, tb)
    idx = _pad_rows(knn_indices(p, o, nsample), Nb)                      # (Nb, K) int32
    p8 = _pad_rows(jnp.pad(p, ((0, 0), (0, P_PAD - p.shape[1]))), Nb)    # (Nb, 8) f32
    pr_g = (p8[idx] - p8[:, None, :]).astype(jnp.bfloat16)               # (Nb, K, 8) bf16
    kv_g = kv[idx]                                                       # (Nb, K, 2C) bf16

    # Kernel 2: attention + bn2/linear3/bn3 + residual + ReLU, all fused per tile.
    out = attn_block(_fit_rows(qx0, Nb), kv_g, pr_g, kp,
                     tile_n=tb, vmem_limit=vmem_limit)
    return out[:N]


# ------------------------- parameters & pure-JAX reference -------------------

def init_torch_params(key, in_planes, planes, share_planes):
    """Deterministic parameters in PyTorch layout: Linear weight (out, in)."""
    C = planes
    Cs = C // share_planes
    ks = jax.random.split(key, 20)

    def linear(k, out_dim, in_dim):
        k1, k2 = jax.random.split(k)
        bound = 1.0 / np.sqrt(in_dim)
        W = jax.random.uniform(k1, (out_dim, in_dim), jnp.float32, -bound, bound)
        b = jax.random.uniform(k2, (out_dim,), jnp.float32, -bound, bound)
        return W, b

    def linear_nobias(k, out_dim, in_dim):
        bound = 1.0 / np.sqrt(in_dim)
        return jax.random.uniform(k, (out_dim, in_dim), jnp.float32, -bound, bound)

    def bn(k, dim):
        k1, k2, k3, k4 = jax.random.split(k, 4)
        gamma = jax.random.uniform(k1, (dim,), jnp.float32, 0.8, 1.2)
        beta = jax.random.uniform(k2, (dim,), jnp.float32, -0.1, 0.1)
        mean = jax.random.uniform(k3, (dim,), jnp.float32, -0.1, 0.1)
        var = jax.random.uniform(k4, (dim,), jnp.float32, 0.9, 1.1)
        return gamma, beta, mean, var

    tp = {}
    tp["wtd"] = linear_nobias(ks[0], C, in_planes)
    tp["bntd"] = bn(ks[1], C)
    tp["w1"] = linear_nobias(ks[2], C, C)
    tp["bn1"] = bn(ks[3], C)
    tp["wq"], tp["bq"] = linear(ks[4], C, C)
    tp["wk"], tp["bk"] = linear(ks[5], C, C)
    tp["wv"], tp["bv"] = linear(ks[6], C, C)
    tp["wp1"], tp["bp1"] = linear(ks[7], 3, 3)
    tp["wp2"], tp["bp2"] = linear(ks[8], C, 3)
    tp["ww1"], tp["bw1"] = linear(ks[9], Cs, C)
    tp["ww2"], tp["bw2"] = linear(ks[10], Cs, Cs)
    tp["bnp"] = bn(ks[11], 3)
    tp["bnw0"] = bn(ks[12], C)
    tp["bnw1"] = bn(ks[13], Cs)
    tp["bn2"] = bn(ks[14], C)
    tp["w3"] = linear_nobias(ks[15], C, C)
    tp["bn3"] = bn(ks[16], C)
    return tp


def _bn_eval(x, bn_params):
    gamma, beta, mean, var = bn_params
    return (x - mean) / jnp.sqrt(var + EPS) * gamma + beta


def reference_forward(p, x, o, tp, nsample, share_planes):
    relu = jax.nn.relu
    # TransitionDown (stride=1)
    x0 = relu(_bn_eval(x @ tp["wtd"].T, tp["bntd"]))
    identity = x0
    x1 = relu(_bn_eval(x0 @ tp["w1"].T, tp["bn1"]))
    # PointTransformerLayer
    xq = x1 @ tp["wq"].T + tp["bq"]
    xk = x1 @ tp["wk"].T + tp["bk"]
    xv = x1 @ tp["wv"].T + tp["bv"]
    idx = knn_indices(p, o, nsample)
    p_r = p[idx] - p[:, None, :]
    xk_g, xv_g = xk[idx], xv[idx]
    h = p_r @ tp["wp1"].T + tp["bp1"]
    h = relu(_bn_eval(h, tp["bnp"]))
    p_r = h @ tp["wp2"].T + tp["bp2"]
    w = xk_g - xq[:, None, :] + p_r
    w = relu(_bn_eval(w, tp["bnw0"]))
    w = w @ tp["ww1"].T + tp["bw1"]
    w = relu(_bn_eval(w, tp["bnw1"]))
    w = w @ tp["ww2"].T + tp["bw2"]
    w = jax.nn.softmax(w, axis=1)
    n, K, C = xv_g.shape
    s = share_planes
    y = ((xv_g + p_r).reshape(n, K, s, C // s) * w[:, :, None, :]).sum(1).reshape(n, C)
    # bn2 + relu, linear3 + bn3, residual, relu
    x2 = relu(_bn_eval(y, tp["bn2"]))
    x3 = _bn_eval(x2 @ tp["w3"].T, tp["bn3"])
    return relu(x3 + identity)


# ------------------------------------ main -----------------------------------

if __name__ == "__main__":
    # N deliberately not a multiple of 16 to exercise the ragged-N padding path.
    N, in_planes, planes = 60, 32, 64
    share_planes, nsample = 8, 16

    key = jax.random.PRNGKey(0)
    k_p, k_x, k_param = jax.random.split(key, 3)
    p = jax.random.uniform(k_p, (N, 3), jnp.float32)
    x = jax.random.normal(k_x, (N, in_planes), jnp.float32)
    o = jnp.array([N], dtype=jnp.int32)          # single batch segment

    tp = init_torch_params(k_param, in_planes, planes, share_planes)
    kp = make_kernel_params(tp)

    out = point_transformer_block_forward(p, x, o, kp, nsample)
    out = jax.block_until_ready(out)

    ref = reference_forward(p, x, o, tp, nsample, share_planes)
    # Tolerance loosened because the gathered neighbour tensors are streamed in
    # bfloat16 and the softmax uses the EUP approximate reciprocal.
    np.testing.assert_allclose(np.asarray(out), np.asarray(ref), rtol=3e-2, atol=3e-2)
    print("KERNEL_OK")
</pallas_src>

<mosaic_0001>
module attributes {stable_mosaic.version = 11 : i64} {
  func.func @_pre_kernel(%arg0: i32, %arg1: memref<32x32xf32, #tpu.memory_space<vmem>>, %arg2: memref<32x64xf32, #tpu.memory_space<vmem>>, %arg3: memref<1x64xf32, #tpu.memory_space<vmem>>, %arg4: memref<64x64xf32, #tpu.memory_space<vmem>>, %arg5: memref<1x64xf32, #tpu.memory_space<vmem>>, %arg6: memref<64x64xf32, #tpu.memory_space<vmem>>, %arg7: memref<1x64xf32, #tpu.memory_space<vmem>>, %arg8: memref<64x128xf32, #tpu.memory_space<vmem>>, %arg9: memref<1x128xf32, #tpu.memory_space<vmem>>, %arg10: memref<32x128xf32, #tpu.memory_space<vmem>>, %arg11: memref<32x128xbf16, #tpu.memory_space<vmem>>) attributes {dimension_semantics = [#tpu.dimension_semantics<parallel>], iteration_bounds = array<i64: 2>, scalar_prefetch = 0 : i64, scratch_operands = 0 : i64, tpu.core_type = #tpu.core_type<tc>, window_params = [{transform_indices = @transform_0, window_bounds = array<i64: 32, 32>}, {pipeline_mode = #tpu.pipeline_mode<synchronous>, transform_indices = @transform_1, window_bounds = array<i64: 32, 64>}, {pipeline_mode = #tpu.pipeline_mode<synchronous>, transform_indices = @transform_2, window_bounds = array<i64: 1, 64>}, {pipeline_mode = #tpu.pipeline_mode<synchronous>, transform_indices = @transform_3, window_bounds = array<i64: 64, 64>}, {pipeline_mode = #tpu.pipeline_mode<synchronous>, transform_indices = @transform_4, window_bounds = array<i64: 1, 64>}, {pipeline_mode = #tpu.pipeline_mode<synchronous>, transform_indices = @transform_5, window_bounds = array<i64: 64, 64>}, {pipeline_mode = #tpu.pipeline_mode<synchronous>, transform_indices = @transform_6, window_bounds = array<i64: 1, 64>}, {pipeline_mode = #tpu.pipeline_mode<synchronous>, transform_indices = @transform_7, window_bounds = array<i64: 64, 128>}, {pipeline_mode = #tpu.pipeline_mode<synchronous>, transform_indices = @transform_8, window_bounds = array<i64: 1, 128>}, {transform_indices = @transform_9, window_bounds = array<i64: 32, 128>}, {transform_indices = @transform_10, window_bounds = array<i64: 32, 128>}]} {
    %c0 = arith.constant 0 : index
    %c0_0 = arith.constant 0 : index
    %0 = vector.load %arg1[%c0, %c0_0] : memref<32x32xf32, #tpu.memory_space<vmem>>, vector<32x32xf32>
    %c0_1 = arith.constant 0 : index
    %c0_2 = arith.constant 0 : index
    %1 = vector.load %arg2[%c0_1, %c0_2] : memref<32x64xf32, #tpu.memory_space<vmem>>, vector<32x64xf32>
    %cst = arith.constant dense<0.000000e+00> : vector<32x64xf32>
    %2 = tpu.matmul %0, %1, %cst {dimension_numbers = #tpu.dot_dimension_numbers<[1], [0], [0], [1], [0, 0, 1, 1], [], []>} : vector<32x32xf32>, vector<32x64xf32>, vector<32x64xf32> -> vector<32x64xf32>
    %c0_3 = arith.constant 0 : index
    %c0_4 = arith.constant 0 : index
    %3 = vector.load %arg3[%c0_3, %c0_4] : memref<1x64xf32, #tpu.memory_space<vmem>>, vector<1x64xf32>
    %4 = vector.broadcast %3 : vector<1x64xf32> to vector<32x64xf32>
    %5 = arith.addf %2, %4 : vector<32x64xf32>
    %cst_5 = arith.constant 0.000000e+00 : f32
    %6 = vector.broadcast %cst_5 : f32 to vector<32x64xf32>
    %7 = arith.maximumf %5, %6 : vector<32x64xf32>
    %c0_6 = arith.constant 0 : index
    %c0_7 = arith.constant 0 : index
    %8 = vector.load %arg4[%c0_6, %c0_7] : memref<64x64xf32, #tpu.memory_space<vmem>>, vector<64x64xf32>
    %cst_8 = arith.constant dense<0.000000e+00> : vector<32x64xf32>
    %9 = tpu.matmul %7, %8, %cst_8 {dimension_numbers = #tpu.dot_dimension_numbers<[1], [0], [0], [1], [0, 0, 1, 1], [], []>} : vector<32x64xf32>, vector<64x64xf32>, vector<32x64xf32> -> vector<32x64xf32>
    %c0_9 = arith.constant 0 : index
    %c0_10 = arith.constant 0 : index
    %10 = vector.load %arg5[%c0_9, %c0_10] : memref<1x64xf32, #tpu.memory_space<vmem>>, vector<1x64xf32>
    %11 = vector.broadcast %10 : vector<1x64xf32> to vector<32x64xf32>
    %12 = arith.addf %9, %11 : vector<32x64xf32>
    %cst_11 = arith.constant 0.000000e+00 : f32
    %13 = vector.broadcast %cst_11 : f32 to vector<32x64xf32>
    %14 = arith.maximumf %12, %13 : vector<32x64xf32>
    %c0_12 = arith.constant 0 : index
    %c0_13 = arith.constant 0 : index
    %15 = vector.load %arg10[%c0_12, %c0_13] : memref<32x128xf32, #tpu.memory_space<vmem>>, vector<32x64xf32>
    tpu.vector_store %arg10[%c0_12, %c0_13], %7 {strides = array<i32>} : memref<32x128xf32, #tpu.memory_space<vmem>>, vector<32x64xf32>,
    %c0_14 = arith.constant 0 : index
    %c0_15 = arith.constant 0 : index
    %16 = vector.load %arg6[%c0_14, %c0_15] : memref<64x64xf32, #tpu.memory_space<vmem>>, vector<64x64xf32>
    %cst_16 = arith.constant dense<0.000000e+00> : vector<32x64xf32>
    %17 = tpu.matmul %14, %16, %cst_16 {dimension_numbers = #tpu.dot_dimension_numbers<[1], [0], [0], [1], [0, 0, 1, 1], [], []>} : vector<32x64xf32>, vector<64x64xf32>, vector<32x64xf32> -> vector<32x64xf32>
    %c0_17 = arith.constant 0 : index
    %c0_18 = arith.constant 0 : index
    %18 = vector.load %arg7[%c0_17, %c0_18] : memref<1x64xf32, #tpu.memory_space<vmem>>, vector<1x64xf32>
    %19 = vector.broadcast %18 : vector<1x64xf32> to vector<32x64xf32>
    %20 = arith.addf %17, %19 : vector<32x64xf32>
    %c0_19 = arith.constant 0 : index
    %c64 = arith.constant 64 : index
    %21 = vector.load %arg10[%c0_19, %c64] : memref<32x128xf32, #tpu.memory_space<vmem>>, vector<32x64xf32>
    tpu.vector_store %arg10[%c0_19, %c64], %20 {strides = array<i32>} : memref<32x128xf32, #tpu.memory_space<vmem>>, vector<32x64xf32>,
    %c0_20 = arith.constant 0 : index
    %c0_21 = arith.constant 0 : index
    %22 = vector.load %arg8[%c0_20, %c0_21] : memref<64x128xf32, #tpu.memory_space<vmem>>, vector<64x128xf32>
    %cst_22 = arith.constant dense<0.000000e+00> : vector<32x128xf32>
    %23 = tpu.matmul %14, %22, %cst_22 {dimension_numbers = #tpu.dot_dimension_numbers<[1], [0], [0], [1], [0, 0, 1, 1], [], []>} : vector<32x64xf32>, vector<64x128xf32>, vector<32x128xf32> -> vector<32x128xf32>
    %c0_23 = arith.constant 0 : index
    %c0_24 = arith.constant 0 : index
    %24 = vector.load %arg9[%c0_23, %c0_24] : memref<1x128xf32, #tpu.memory_space<vmem>>, vector<1x128xf32>
    %25 = vector.broadcast %24 : vector<1x128xf32> to vector<32x128xf32>
    %26 = arith.addf %23, %25 : vector<32x128xf32>
    %27 = arith.truncf %26 : vector<32x128xf32> to vector<32x128xbf16>
    %c0_25 = arith.constant 0 : index
    %c0_26 = arith.constant 0 : index
    %28 = vector.load %arg11[%c0_25, %c0_26] : memref<32x128xbf16, #tpu.memory_space<vmem>>, vector<32x128xbf16>
    tpu.vector_store %arg11[%c0_25, %c0_26], %27 {strides = array<i32>} : memref<32x128xbf16, #tpu.memory_space<vmem>>, vector<32x128xbf16>,
    return
  }
  func.func @transform_0(%arg0: i32) -> (i32, i32) {
    %c0_i32 = arith.constant 0 : i32
    %c0_i32_0 = arith.constant 0 : i32
    return %arg0, %c0_i32 : i32, i32
  }
  func.func @transform_1(%arg0: i32) -> (i32, i32) {
    %c0_i32 = arith.constant 0 : i32
    %c0_i32_0 = arith.constant 0 : i32
    %c0_i32_1 = arith.constant 0 : i32
    return %c0_i32, %c0_i32_0 : i32, i32
  }
  func.func @transform_2(%arg0: i32) -> (i32, i32) {
    %c0_i32 = arith.constant 0 : i32
    %c0_i32_0 = arith.constant 0 : i32
    %c0_i32_1 = arith.constant 0 : i32
    return %c0_i32, %c0_i32_0 : i32, i32
  }
  func.func @transform_3(%arg0: i32) -> (i32, i32) {
    %c0_i32 = arith.constant 0 : i32
    %c0_i32_0 = arith.constant 0 : i32
    %c0_i32_1 = arith.constant 0 : i32
    return %c0_i32, %c0_i32_0 : i32, i32
  }
  func.func @transform_4(%arg0: i32) -> (i32, i32) {
    %c0_i32 = arith.constant 0 : i32
    %c0_i32_0 = arith.constant 0 : i32
    %c0_i32_1 = arith.constant 0 : i32
    return %c0_i32, %c0_i32_0 : i32, i32
  }
  func.func @transform_5(%arg0: i32) -> (i32, i32) {
    %c0_i32 = arith.constant 0 : i32
    %c0_i32_0 = arith.constant 0 : i32
    %c0_i32_1 = arith.constant 0 : i32
    return %c0_i32, %c0_i32_0 : i32, i32
  }
  func.func @transform_6(%arg0: i32) -> (i32, i32) {
    %c0_i32 = arith.constant 0 : i32
    %c0_i32_0 = arith.constant 0 : i32
    %c0_i32_1 = arith.constant 0 : i32
    return %c0_i32, %c0_i32_0 : i32, i32
  }
  func.func @transform_7(%arg0: i32) -> (i32, i32) {
    %c0_i32 = arith.constant 0 : i32
    %c0_i32_0 = arith.constant 0 : i32
    %c0_i32_1 = arith.constant 0 : i32
    return %c0_i32, %c0_i32_0 : i32, i32
  }
  func.func @transform_8(%arg0: i32) -> (i32, i32) {
    %c0_i32 = arith.constant 0 : i32
    %c0_i32_0 = arith.constant 0 : i32
    %c0_i32_1 = arith.constant 0 : i32
    return %c0_i32, %c0_i32_0 : i32, i32
  }
  func.func @transform_9(%arg0: i32) -> (i32, i32) {
    %c0_i32 = arith.constant 0 : i32
    %c0_i32_0 = arith.constant 0 : i32
    return %arg0, %c0_i32 : i32, i32
  }
  func.func @transform_10(%arg0: i32) -> (i32, i32) {
    %c0_i32 = arith.constant 0 : i32
    %c0_i32_0 = arith.constant 0 : i32
    return %arg0, %c0_i32 : i32, i32
  }
}

</mosaic_0001>

<llo_original>
// kernel: tpu_custom_call.1
$region0: #{tpu_custom_call.1}
  #allocation0 [shape = 'u32[]', space=smem, size = 0x4, offset = 0x4, fixed_abs, tag = 'smem constant byte address 0x4 - core index']
  #allocation1 [shape = 'u32[72,128]{1,0:T(1,128)}', space=vmem, size = 0x9000, scoped, tag = 'internal scratch']
  %s0 = inlined_call_operand.vmem [shape: f32[64,32], index: 0, kind: input, shape index: {}]
  %s1 = inlined_call_operand.vmem [shape: f32[32,64], index: 1, kind: input, shape index: {}]
  %s2 = inlined_call_operand.vmem [shape: f32[1,64], index: 2, kind: input, shape index: {}]
  %s3 = inlined_call_operand.vmem [shape: f32[64,64], index: 3, kind: input, shape index: {}]
  %s4 = inlined_call_operand.vmem [shape: f32[1,64], index: 4, kind: input, shape index: {}]
  %s5 = inlined_call_operand.hbm [shape: f32[64,64], index: 5, kind: input, shape index: {}]
  %s6 = inlined_call_operand.vmem [shape: f32[1,64], index: 6, kind: input, shape index: {}]
  %s7 = inlined_call_operand.hbm [shape: f32[64,128], index: 7, kind: input, shape index: {}]
  %s8 = inlined_call_operand.vmem [shape: f32[1,128], index: 8, kind: input, shape index: {}]
  %s9 = inlined_call_operand.hbm [shape: f32[64,128], index: 9, kind: output, shape index: {0}]
  %s10 = inlined_call_operand.hbm [shape: bf16[64,128], index: 10, kind: output, shape index: {1}]
  %11 = xla_tuple %s9, %s10
  %s12 = sld [smem:[#allocation0]]
  $region85: #{tpu_custom_call.1} parent=0
    _
  %s14 = ssub.s32 1, %s12
  %s15 = scalar_select 0, %s14, %s12
  $region1: #{tpu_custom_call.1} parent=0
    #allocation2 [shape = 'u8[32768]{0}', space=vmem, size = 0x8000, scoped, tag = 'input window, operand 5, single buffered']
    #allocation3 [shape = 's32[2]{0}', space=sflag, size = 0x8, scoped, tag = 'scoped memory for tpu_custom_call.1']
    #allocation4 [shape = 's32[2]{0}', space=sflag, size = 0x8, scoped, tag = 'scoped memory for tpu_custom_call.1']
    #allocation5 [shape = 'u8[32768]{0}', space=vmem, size = 0x8000, scoped, tag = 'input window, operand 7, single buffered']
    #allocation6 [shape = 's32[1]{0}', space=sflag, size = 0x4, scoped, tag = 'scoped memory for tpu_custom_call.1']
    #allocation7 [shape = 'u8[32768]{0}', space=vmem, size = 0x8000, scoped, tag = 'output window, operand 0']
    #allocation8 [shape = 'u8[16384]{0}', space=vmem, size = 0x4000, scoped, tag = 'output window, operand 1']
    #allocation9 [shape = 's32[2]{0}', space=sflag, size = 0x8, scoped, tag = 'scoped memory for tpu_custom_call.1']
    %16 = vsyncpa [#allocation3], 0
    %17 = vsyncpa [#allocation6], 0
    %18 = vsyncpa [#allocation4], 0
    %s19 = scalar_lea.sflag [#allocation4], 1
    %20 = vsyncpa %s19, 0
    %21 = vsyncpa [#allocation9], 0
    %s22 = scalar_lea.sflag [#allocation9], 1
    %23 = vsyncpa %s22, 0
    loop: start=0, step=1, limit=4
    $region2: #{tpu_custom_call.1} parent=1 // loop_pre_header
      _
    $region3: #{tpu_custom_call.1} parent=1 // loop_header
      %s25 = sphi 0, %s29
      %p26 = scmp.ge.s32.totalorder %s25, 4
      %s35 = sphi 0, %s37
      %s38 = sphi 0, %s35
      %s39 = sphi 0, %s38
      %s55 = sphi 0, %s39
      %s59 = sphi 0, %s59
      %s61 = sphi 0, %s59
      %s62 = sphi 0, %s61
      %s76 = sphi 0, %s62
      %s80 = sphi 0, %s80
      %s82 = sphi 0, %s80
      %s83 = sphi 0, %s82
      %s97 = sphi 0, %s83
      %s101 = sphi 0, %s101
      %s103 = sphi 0, %s101
      %s104 = sphi 0, %s103
      %s118 = sphi 0, %s104
      %s122 = sphi 0, %s122
      %s124 = sphi 0, %s122
      %s125 = sphi 0, %s124
      %s139 = sphi 0, %s125
      %s143 = sphi 0, %s143
      %s145 = sphi 0, %s143
      %s146 = sphi 0, %s145
      %s160 = sphi 0, %s146
      %s164 = sphi 0, %s164
      %s166 = sphi 0, %s164
      %s167 = sphi 0, %s166
      %s181 = sphi 0, %s167
      %s185 = sphi 0, %s185
      %s187 = sphi 0, %s185
      %s188 = sphi 0, %s187
      %s202 = sphi 0, %s188
      %s206 = sphi 0, %s206
      %s208 = sphi 0, %s206
      %s209 = sphi 0, %s208
      %s223 = sphi 0, %s209
      %s229 = sphi 0, %s231
      %s232 = sphi 0, %s229
      %s233 = sphi 0, %s232
      %s249 = sphi 0, %s233
      %s255 = sphi 0, %s257
      %s258 = sphi 0, %s255
      %s259 = sphi 0, %s258
      %s275 = sphi 0, %s259
    $region4: #{tpu_custom_call.1} parent=1 // loop_header_branch
      %28 = sbr.rel (%p26) target = $region8
    $region5: #{tpu_custom_call.1} parent=1 // loop_body
      %s30 = ssub.s32 %s25, 1
      %s31 = ssub.s32 %s25, 2
      %s32 = sadd.s32 %s25, 1
      %s33 = ssub.s32 %s25, %s32
      %p34 = scmp.eq.s32.totalorder %s33, 0
      %s36 = sadd.s32 %s35, 1
      %s37 = scalar_select %p34, %s35, %s36
      %p40 = pneg %p34
      %p41 = scmp.eq.s32.totalorder %s25, 1
      %p42 = por %p40, %p41
      %p43 = scmp.ne.s32.totalorder %s35, %s38
      %p44 = scmp.eq.s32.totalorder %s25, 0
      %p45 = por %p43, %p44
      %p46 = scmp.ne.s32.totalorder %s35, %s38
      %p47 = scmp.eq.s32.totalorder %s30, 1
      %p48 = por %p46, %p47
      %p49 = scmp.ne.s32.totalorder %s38, %s39
      %p50 = scmp.eq.s32.totalorder %s30, 0
      %p51 = por %p49, %p50
      %p52 = scmp.ne.s32.totalorder %s38, %s39
      %p53 = scmp.eq.s32.totalorder %s31, 1
      %p54 = por %p52, %p53
      %p56 = scmp.ne.s32.totalorder %s39, %s55
      %p57 = scmp.eq.s32.totalorder %s31, 0
      %p58 = por %p56, %p57
      %s60 = sadd.s32 %s59, 1
      %p63 = scmp.eq.s32.totalorder %s25, 1
      %p64 = scmp.ne.s32.totalorder %s59, %s61
      %p65 = scmp.eq.s32.totalorder %s25, 0
      %p66 = por %p64, %p65
      %p67 = scmp.ne.s32.totalorder %s59, %s61
      %p68 = scmp.eq.s32.totalorder %s30, 1
      %p69 = por %p67, %p68
      %p70 = scmp.ne.s32.totalorder %s61, %s62
      %p71 = scmp.eq.s32.totalorder %s30, 0
      %p72 = por %p70, %p71
      %p73 = scmp.ne.s32.totalorder %s61, %s62
      %p74 = scmp.eq.s32.totalorder %s31, 1
      %p75 = por %p73, %p74
      %p77 = scmp.ne.s32.totalorder %s62, %s76
      %p78 = scmp.eq.s32.totalorder %s31, 0
      %p79 = por %p77, %p78
      %s81 = sadd.s32 %s80, 1
      %p84 = scmp.eq.s32.totalorder %s25, 1
      %p85 = scmp.ne.s32.totalorder %s80, %s82
      %p86 = scmp.eq.s32.totalorder %s25, 0
      %p87 = por %p85, %p86
      %p88 = scmp.ne.s32.totalorder %s80, %s82
      %p89 = scmp.eq.s32.totalorder %s30, 1
      %p90 = por %p88, %p89
      %p91 = scmp.ne.s32.totalorder %s82, %s83
      %p92 = scmp.eq.s32.totalorder %s30, 0
      %p93 = por %p91, %p92
      %p94 = scmp.ne.s32.totalorder %s82, %s83
      %p95 = scmp.eq.s32.totalorder %s31, 1
      %p96 = por %p94, %p95
      %p98 = scmp.ne.s32.totalorder %s83, %s97
      %p99 = scmp.eq.s32.totalorder %s31, 0
      %p100 = por %p98, %p99
      %s102 = sadd.s32 %s101, 1
      %p105 = scmp.eq.s32.totalorder %s25, 1
      %p106 = scmp.ne.s32.totalorder %s101, %s103
      %p107 = scmp.eq.s32.totalorder %s25, 0
      %p108 = por %p106, %p107
      %p109 = scmp.ne.s32.totalorder %s101, %s103
      %p110 = scmp.eq.s32.totalorder %s30, 1
      %p111 = por %p109, %p110
      %p112 = scmp.ne.s32.totalorder %s103, %s104
      %p113 = scmp.eq.s32.totalorder %s30, 0
      %p114 = por %p112, %p113
      %p115 = scmp.ne.s32.totalorder %s103, %s104
      %p116 = scmp.eq.s32.totalorder %s31, 1
      %p117 = por %p115, %p116
      %p119 = scmp.ne.s32.totalorder %s104, %s118
      %p120 = scmp.eq.s32.totalorder %s31, 0
      %p121 = por %p119, %p120
      %s123 = sadd.s32 %s122, 1
      %p126 = scmp.eq.s32.totalorder %s25, 1
      %p127 = scmp.ne.s32.totalorder %s122, %s124
      %p128 = scmp.eq.s32.totalorder %s25, 0
      %p129 = por %p127, %p128
      %p130 = scmp.ne.s32.totalorder %s122, %s124
      %p131 = scmp.eq.s32.totalorder %s30, 1
      %p132 = por %p130, %p131
      %p133 = scmp.ne.s32.totalorder %s124, %s125
      %p134 = scmp.eq.s32.totalorder %s30, 0
      %p135 = por %p133, %p134
      %p136 = scmp.ne.s32.totalorder %s124, %s125
      %p137 = scmp.eq.s32.totalorder %s31, 1
      %p138 = por %p136, %p137
      %p140 = scmp.ne.s32.totalorder %s125, %s139
      %p141 = scmp.eq.s32.totalorder %s31, 0
      %p142 = por %p140, %p141
      %s144 = sadd.s32 %s143, 1
      %p147 = scmp.eq.s32.totalorder %s25, 1
      %p148 = scmp.ne.s32.totalorder %s143, %s145
      %p149 = scmp.eq.s32.totalorder %s25, 0
      %p150 = por %p148, %p149
      %p151 = scmp.ne.s32.totalorder %s143, %s145
      %p152 = scmp.eq.s32.totalorder %s30, 1
      %p153 = por %p151, %p152
      %p154 = scmp.ne.s32.totalorder %s145, %s146
      %p155 = scmp.eq.s32.totalorder %s30, 0
      %p156 = por %p154, %p155
      %p157 = scmp.ne.s32.totalorder %s145, %s146
      %p158 = scmp.eq.s32.totalorder %s31, 1
      %p159 = por %p157, %p158
      %p161 = scmp.ne.s32.totalorder %s146, %s160
      %p162 = scmp.eq.s32.totalorder %s31, 0
      %p163 = por %p161, %p162
      %s165 = sadd.s32 %s164, 1
      %p168 = scmp.eq.s32.totalorder %s25, 1
      %p169 = scmp.ne.s32.totalorder %s164, %s166
      %p170 = scmp.eq.s32.totalorder %s25, 0
      %p171 = por %p169, %p170
      %p172 = scmp.ne.s32.totalorder %s164, %s166
      %p173 = scmp.eq.s32.totalorder %s30, 1
      %p174 = por %p172, %p173
      %p175 = scmp.ne.s32.totalorder %s166, %s167
      %p176 = scmp.eq.s32.totalorder %s30, 0
      %p177 = por %p175, %p176
      %p178 = scmp.ne.s32.totalorder %s166, %s167
      %p179 = scmp.eq.s32.totalorder %s31, 1
      %p180 = por %p178, %p179
      %p182 = scmp.ne.s32.totalorder %s167, %s181
      %p183 = scmp.eq.s32.totalorder %s31, 0
      %p184 = por %p182, %p183
      %s186 = sadd.s32 %s185, 1
      %p189 = scmp.eq.s32.totalorder %s25, 1
      %p190 = scmp.ne.s32.totalorder %s185, %s187
      %p191 = scmp.eq.s32.totalorder %s25, 0
      %p192 = por %p190, %p191
      %p193 = scmp.ne.s32.totalorder %s185, %s187
      %p194 = scmp.eq.s32.totalorder %s30, 1
      %p195 = por %p193, %p194
      %p196 = scmp.ne.s32.totalorder %s187, %s188
      %p197 = scmp.eq.s32.totalorder %s30, 0
      %p198 = por %p196, %p197
      %p199 = scmp.ne.s32.totalorder %s187, %s188
      %p200 = scmp.eq.s32.totalorder %s31, 1
      %p201 = por %p199, %p200
      %p203 = scmp.ne.s32.totalorder %s188, %s202
      %p204 = scmp.eq.s32.totalorder %s31, 0
      %p205 = por %p203, %p204
      %s207 = sadd.s32 %s206, 1
      %p210 = scmp.eq.s32.totalorder %s25, 1
      %p211 = scmp.ne.s32.totalorder %s206, %s208
      %p212 = scmp.eq.s32.totalorder %s25, 0
      %p213 = por %p211, %p212
      %p214 = scmp.ne.s32.totalorder %s206, %s208
      %p215 = scmp.eq.s32.totalorder %s30, 1
      %p216 = por %p214, %p215
      %p217 = scmp.ne.s32.totalorder %s208, %s209
      %p218 = scmp.eq.s32.totalorder %s30, 0
      %p219 = por %p217, %p218
      %p220 = scmp.ne.s32.totalorder %s208, %s209
      %p221 = scmp.eq.s32.totalorder %s31, 1
      %p222 = por %p220, %p221
      %p224 = scmp.ne.s32.totalorder %s209, %s223
      %p225 = scmp.eq.s32.totalorder %s31, 0
      %p226 = por %p224, %p225
      %s227 = ssub.s32 %s25, %s32
      %p228 = scmp.eq.s32.totalorder %s227, 0
      %s230 = sadd.s32 %s229, 1
      %s231 = scalar_select %p228, %s229, %s230
      %p234 = pneg %p228
      %p235 = scmp.eq.s32.totalorder %s25, 1
      %p236 = por %p234, %p235
      %p237 = scmp.ne.s32.totalorder %s229, %s232
      %p238 = scmp.eq.s32.totalorder %s25, 0
      %p239 = por %p237, %p238
      %p240 = scmp.ne.s32.totalorder %s229, %s232
      %p241 = scmp.eq.s32.totalorder %s30, 1
      %p242 = por %p240, %p241
      %p243 = scmp.ne.s32.totalorder %s232, %s233
      %p244 = scmp.eq.s32.totalorder %s30, 0
      %p245 = por %p243, %p244
      %p246 = scmp.ne.s32.totalorder %s232, %s233
      %p247 = scmp.eq.s32.totalorder %s31, 1
      %p248 = por %p246, %p247
      %p250 = scmp.ne.s32.totalorder %s233, %s249
      %p251 = scmp.eq.s32.totalorder %s31, 0
      %p252 = por %p250, %p251
      %s253 = ssub.s32 %s25, %s32
      %p254 = scmp.eq.s32.totalorder %s253, 0
      %s256 = sadd.s32 %s255, 1
      %s257 = scalar_select %p254, %s255, %s256
      %p260 = pneg %p254
      %p261 = scmp.eq.s32.totalorder %s25, 1
      %p262 = por %p260, %p261
      %p263 = scmp.ne.s32.totalorder %s255, %s258
      %p264 = scmp.eq.s32.totalorder %s25, 0
      %p265 = por %p263, %p264
      %p266 = scmp.ne.s32.totalorder %s255, %s258
      %p267 = scmp.eq.s32.totalorder %s30, 1
      %p268 = por %p266, %p267
      %p269 = scmp.ne.s32.totalorder %s258, %s259
      %p270 = scmp.eq.s32.totalorder %s30, 0
      %p271 = por %p269, %p270
      %p272 = scmp.ne.s32.totalorder %s258, %s259
      %p273 = scmp.eq.s32.totalorder %s31, 1
      %p274 = por %p272, %p273
      %p276 = scmp.ne.s32.totalorder %s259, %s275
      %p277 = scmp.eq.s32.totalorder %s31, 0
      %p278 = por %p276, %p277
      %p279 = scmp.le.s32.totalorder 1, %s25
      %p280 = scmp.lt.s32.totalorder %s25, 3
      %p281 = pnand %p279, %p280
      %p282 = pneg %p281
      // Predicated region
      $region9: #{tpu_custom_call.1} parent=5 // pred_check
        _
      $region10: #{tpu_custom_call.1} parent=5 // pred_check_branch
        %284 = sbr.rel (%p281) target = $region12
      $region11: #{tpu_custom_call.1} parent=5 // pred_region
        %s285 = ssub.s32 %s25, 1
        // Predicated region
        $region13: #{tpu_custom_call.1} parent=11 // pred_check
          %p286 = pneg %p72
        $region14: #{tpu_custom_call.1} parent=11 // pred_check_branch
          %288 = sbr.rel (%p286) target = $region16
        $region15: #{tpu_custom_call.1} parent=11 // pred_region
          _
        $region16: #{tpu_custom_call.1} parent=11 // pred_fallthru
          _
        // Predicated region
        $region17: #{tpu_custom_call.1} parent=11 // pred_check
          %p289 = pneg %p93
        $region18: #{tpu_custom_call.1} parent=11 // pred_check_branch
          %291 = sbr.rel (%p289) target = $region20
        $region19: #{tpu_custom_call.1} parent=11 // pred_region
          _
        $region20: #{tpu_custom_call.1} parent=11 // pred_fallthru
          _
        // Predicated region
        $region21: #{tpu_custom_call.1} parent=11 // pred_check
          %p292 = pneg %p114
        $region22: #{tpu_custom_call.1} parent=11 // pred_check_branch
          %294 = sbr.rel (%p292) target = $region24
        $region23: #{tpu_custom_call.1} parent=11 // pred_region
          _
        $region24: #{tpu_custom_call.1} parent=11 // pred_fallthru
          _
        // Predicated region
        $region25: #{tpu_custom_call.1} parent=11 // pred_check
          %p295 = pneg %p135
        $region26: #{tpu_custom_call.1} parent=11 // pred_check_branch
          %297 = sbr.rel (%p295) target = $region28
        $region27: #{tpu_custom_call.1} parent=11 // pred_region
          _
        $region28: #{tpu_custom_call.1} parent=11 // pred_fallthru
          _
        // Predicated region
        $region29: #{tpu_custom_call.1} parent=11 // pred_check
          %p298 = pneg %p156
        $region30: #{tpu_custom_call.1} parent=11 // pred_check_branch
          %300 = sbr.rel (%p298) target = $region32
        $region31: #{tpu_custom_call.1} parent=11 // pred_region
          %302 = vsyncadd [#allocation3], 0
          %s303 = sshll.u32 %s5, 4
          %s304 = int_to_ptr.hbm [resolvable:$true] %s303
          %s305 = sshll.u32 [#allocation2], 4
          %s306 = int_to_ptr.vmem [resolvable:$true] %s305
          %311 = dma.hbm_to_vmem [thread:$0]  %s304, 1024, %s306, [#allocation3], 128, 128, 8
        $region32: #{tpu_custom_call.1} parent=11 // pred_fallthru
          _
        // Predicated region
        $region33: #{tpu_custom_call.1} parent=11 // pred_check
          %p312 = pneg %p177
        $region34: #{tpu_custom_call.1} parent=11 // pred_check_branch
          %314 = sbr.rel (%p312) target = $region36
        $region35: #{tpu_custom_call.1} parent=11 // pred_region
          _
        $region36: #{tpu_custom_call.1} parent=11 // pred_fallthru
          _
        // Predicated region
        $region37: #{tpu_custom_call.1} parent=11 // pred_check
          %p315 = pneg %p198
        $region38: #{tpu_custom_call.1} parent=11 // pred_check_branch
          %317 = sbr.rel (%p315) target = $region40
        $region39: #{tpu_custom_call.1} parent=11 // pred_region
          %319 = vsyncadd [#allocation6], 0
          %s320 = sshll.u32 %s7, 4
          %s321 = int_to_ptr.hbm [resolvable:$true] %s320
          %s322 = sshll.u32 [#allocation5], 4
          %s323 = int_to_ptr.vmem [resolvable:$true] %s322
          %328 = dma.hbm_to_vmem [thread:$0]  %s321, 1024, %s323, [#allocation6], 128, 128, 8
        $region40: #{tpu_custom_call.1} parent=11 // pred_fallthru
          _
        // Predicated region
        $region41: #{tpu_custom_call.1} parent=11 // pred_check
          %p329 = pneg %p219
        $region42: #{tpu_custom_call.1} parent=11 // pred_check_branch
          %331 = sbr.rel (%p329) target = $region44
        $region43: #{tpu_custom_call.1} parent=11 // pred_region
          _
        $region44: #{tpu_custom_call.1} parent=11 // pred_fallthru
          _
      $region12: #{tpu_custom_call.1} parent=5 // pred_fallthru
        _
      %p332 = scmp.lt.s32.totalorder %s25, 2
      // Predicated region
      $region45: #{tpu_custom_call.1} parent=5 // pred_check
        %p333 = pneg %p332
      $region46: #{tpu_custom_call.1} parent=5 // pred_check_branch
        %335 = sbr.rel (%p333) target = $region48
      $region47: #{tpu_custom_call.1} parent=5 // pred_region
        // Predicated region
        $region49: #{tpu_custom_call.1} parent=47 // pred_check
          %p336 = pneg %p45
        $region50: #{tpu_custom_call.1} parent=47 // pred_check_branch
          %338 = sbr.rel (%p336) target = $region52
        $region51: #{tpu_custom_call.1} parent=47 // pred_region
          %s339 = smul.u32 4, %s25
          %p340 = scmp.lt.s32.totalorder %s339, 7
          %s341 = scalar_select %p340, %s339, 7
          %s342 = smul.addr %s341, 8
          %s343 = scalar_lea.vmem %s0, %s342
          %s344 = smul.u32 4, %s25
        $region52: #{tpu_custom_call.1} parent=47 // pred_fallthru
          _
      $region48: #{tpu_custom_call.1} parent=5 // pred_fallthru
        _
      %p345 = scmp.le.s32.totalorder 1, %s25
      %p346 = scmp.lt.s32.totalorder %s25, 3
      %p347 = pnand %p345, %p346
      %p348 = pneg %p347
      // Predicated region
      $region53: #{tpu_custom_call.1} parent=5 // pred_check
        _
      $region54: #{tpu_custom_call.1} parent=5 // pred_check_branch
        %350 = sbr.rel (%p347) target = $region56
      $region55: #{tpu_custom_call.1} parent=5 // pred_region
        %s351 = ssub.s32 %s25, 1
        // Predicated region
        $region57: #{tpu_custom_call.1} parent=55 // pred_check
          %p352 = pneg %p156
        $region58: #{tpu_custom_call.1} parent=55 // pred_check_branch
          %354 = sbr.rel (%p352) target = $region60
        $region59: #{tpu_custom_call.1} parent=55 // pred_region
          %356 = dma.done [#allocation3], 1024
        $region60: #{tpu_custom_call.1} parent=55 // pred_fallthru
          _
        // Predicated region
        $region61: #{tpu_custom_call.1} parent=55 // pred_check
          %p357 = pneg %p198
        $region62: #{tpu_custom_call.1} parent=55 // pred_check_branch
          %359 = sbr.rel (%p357) target = $region64
        $region63: #{tpu_custom_call.1} parent=55 // pred_region
          %361 = dma.done [#allocation6], 1024
        $region64: #{tpu_custom_call.1} parent=55 // pred_fallthru
          _
        %s362 = smul.u32 4, %s30
        %p363 = scmp.lt.s32.totalorder %s362, 7
        %s364 = scalar_select %p363, %s362, 7
        %s365 = smul.addr %s364, 8
        %s366 = scalar_lea.vmem %s0, %s365
        %p367 = pneg %p51
        %p368 = pneg %p48
        %p369 = pneg %p72
        %p370 = pneg %p69
        %p371 = pneg %p93
        %p372 = pneg %p90
        %p373 = pneg %p114
        %p374 = pneg %p111
        %p375 = pneg %p135
        %p376 = pneg %p132
        %p377 = pneg %p156
        %p378 = pneg %p153
        %p379 = pneg %p177
        %p380 = pneg %p174
        %p381 = pneg %p198
        %p382 = pneg %p195
        %p383 = pneg %p219
        %p384 = pneg %p216
        %p385 = pneg %p245
        %p386 = pneg %p242
        %s387 = sand.u32 %s232, 1
        %s388 = scalar_lea.sflag [#allocation4], %s387
        %s389 = sand.u32 %s232, 1
        %s390 = smul.addr %s389, 32
        %s391 = scalar_lea.vmem [#allocation7], %s390
        %p392 = pneg %p271
        %p393 = pneg %p268
        %s394 = sand.u32 %s258, 1
        %s395 = scalar_lea.sflag [#allocation9], %s394
        %s396 = sand.u32 %s258, 1
        %s397 = smul.addr %s396, 16
        %s398 = scalar_lea.vmem [#allocation8], %s397
        %s399 = smul.u32 4, %s30
        %p400 = scmp.lt.s32.totalorder %s399, 7
        %s401 = scalar_select %p400, %s399, 7
        %s402 = smul.addr %s401, 8
        %s403 = scalar_lea.vmem %s0, %s402
        %s404 = smul.u32 4, %s30
        %s405 = smul.u32 4, %s30
        %s406 = smul.u32 4, %s30
        %v407 = vld [vmem:[%s403] sm:$0xff]
        %v408 = vld [vmem:[%s403 + $0x8] sm:$0xff]
        %v409 = vld [vmem:[%s403 + $0x10] sm:$0xff]
        %v410 = vld [vmem:[%s403 + $0x18] sm:$0xff]
        %v411 = vld [vmem:[%s1] sm:$0xff]
        %v412 = vld [vmem:[%s1 + $0x8] sm:$0xff]
        %v413 = vld [vmem:[%s1 + $0x10] sm:$0xff]
        %v414 = vld [vmem:[%s1 + $0x18] sm:$0xff]
        %v415 = vld [vmem:[%s2] sm:$0x1]
        %v417 = vperm.slane %v415, 0
        %vm419 = vcmask 261120
        %v421 = vsel %vm419, %v407, 0
        %v424 = vsel %vm419, %v408, 0
        %v427 = vsel %vm419, %v409, 0
        %v430 = vsel %vm419, %v410, 0
        %432 = vmatpush.msra.mxu0 0.0
        %433 = vmatpush.msra.mxu0 0.0
        %434 = vmatpush.msra.mxu0 0.0
        %435 = vmatpush.msra.mxu0 0.0
        %436 = vmatpush.msra.mxu0 0.0
        %437 = vmatpush.msra.mxu0 0.0
        %438 = vmatpush.msra.mxu0 0.0
        %439 = vmatpush.msra.mxu0 0.0
        %440 = vmatpush.msra.mxu0 0.0
        %441 = vmatpush.msra.mxu0 0.0
        %442 = vmatpush.msra.mxu0 0.0
        %443 = vmatpush.msra.mxu0 0.0
        %444 = vmatpush.msra.mxu0 %v414
        %445 = vmatpush.msra.mxu0 %v413
        %446 = vmatpush.msra.mxu0 %v412
        %447 = vmatpush.msra.mxu0 %v411
        %448 = vmatmul.f32.gmra.mxu0 %v421
        %v449 = vpop.f32.mrf.mxu0
        %v450 = vadd.f32 %v417, %v449
        %451 = vmatmul.f32.gmra.mxu0 %v424
        %v452 = vpop.f32.mrf.mxu0
        %v453 = vadd.f32 %v417, %v452
        %454 = vmatmul.f32.gmra.mxu0 %v427
        %v455 = vpop.f32.mrf.mxu0
        %v456 = vadd.f32 %v417, %v455
        %457 = vmatmul.f32.gmra.mxu0 %v430
        %v458 = vpop.f32.mrf.mxu0
        %v459 = vadd.f32 %v417, %v458
        %460 = vdwg.mxu0
        %v461 = vmax.f32 %v450, 0.0
        %v462 = vmax.f32 %v453, 0.0
        %v463 = vmax.f32 %v456, 0.0
        %v464 = vmax.f32 %v459, 0.0
        %v465 = vld [vmem:[%s3] sm:$0xff]
        %v466 = vld [vmem:[%s3 + $0x8] sm:$0xff]
        %v467 = vld [vmem:[%s3 + $0x10] sm:$0xff]
        %v468 = vld [vmem:[%s3 + $0x18] sm:$0xff]
        %v469 = vld [vmem:[%s3 + $0x20] sm:$0xff]
        %v470 = vld [vmem:[%s3 + $0x28] sm:$0xff]
        %v471 = vld [vmem:[%s3 + $0x30] sm:$0xff]
        %v472 = vld [vmem:[%s3 + $0x38] sm:$0xff]
        %v473 = vld [vmem:[%s4] sm:$0x1]
        %v475 = vperm.slane %v473, 0
        %vm477 = vcmask 523264
        %v479 = vsel %vm477, %v461, 0
        %v482 = vsel %vm477, %v462, 0
        %v485 = vsel %vm477, %v463, 0
        %v488 = vsel %vm477, %v464, 0
        %490 = vmatpush.msra.mxu0 0.0
        %491 = vmatpush.msra.mxu0 0.0
        %492 = vmatpush.msra.mxu0 0.0
        %493 = vmatpush.msra.mxu0 0.0
        %494 = vmatpush.msra.mxu0 0.0
        %495 = vmatpush.msra.mxu0 0.0
        %496 = vmatpush.msra.mxu0 0.0
        %497 = vmatpush.msra.mxu0 0.0
        %498 = vmatpush.msra.mxu0 %v472
        %499 = vmatpush.msra.mxu0 %v471
        %500 = vmatpush.msra.mxu0 %v470
        %501 = vmatpush.msra.mxu0 %v469
        %502 = vmatpush.msra.mxu0 %v468
        %503 = vmatpush.msra.mxu0 %v467
        %504 = vmatpush.msra.mxu0 %v466
        %505 = vmatpush.msra.mxu0 %v465
        %506 = vmatmul.f32.gmra.mxu0 %v479
        %v507 = vpop.f32.mrf.mxu0
        %v508 = vadd.f32 %v475, %v507
        %509 = vmatmul.f32.gmra.mxu0 %v482
        %v510 = vpop.f32.mrf.mxu0
        %v511 = vadd.f32 %v475, %v510
        %512 = vmatmul.f32.gmra.mxu0 %v485
        %v513 = vpop.f32.mrf.mxu0
        %v514 = vadd.f32 %v475, %v513
        %515 = vmatmul.f32.gmra.mxu0 %v488
        %v516 = vpop.f32.mrf.mxu0
        %v517 = vadd.f32 %v475, %v516
        %518 = vdwg.mxu0
        %v519 = vmax.f32 %v508, 0.0
        %v520 = vmax.f32 %v511, 0.0
        %v521 = vmax.f32 %v514, 0.0
        %v522 = vmax.f32 %v517, 0.0
        %523 = vst.msk [vmem:[%s391] sm:$0xff] %vm477, %v461
        %524 = vst.msk [vmem:[%s391 + $0x8] sm:$0xff] %vm477, %v462
        %525 = vst.msk [vmem:[%s391 + $0x10] sm:$0xff] %vm477, %v463
        %526 = vst.msk [vmem:[%s391 + $0x18] sm:$0xff] %vm477, %v464
        %v527 = vld [vmem:[#allocation2] sm:$0xff]
        %v528 = vld [vmem:[#allocation2 + $0x8] sm:$0xff]
        %v529 = vld [vmem:[#allocation2 + $0x10] sm:$0xff]
        %v530 = vld [vmem:[#allocation2 + $0x18] sm:$0xff]
        %v531 = vld [vmem:[#allocation2 + $0x20] sm:$0xff]
        %v532 = vld [vmem:[#allocation2 + $0x28] sm:$0xff]
        %v533 = vld [vmem:[#allocation2 + $0x30] sm:$0xff]
        %v534 = vld [vmem:[#allocation2 + $0x38] sm:$0xff]
        %v535 = vld [vmem:[%s6] sm:$0x1]
        %v537 = vperm.slane %v535, 0
        %v540 = vsel %vm477, %v519, 0
        %v543 = vsel %vm477, %v520, 0
        %v546 = vsel %vm477, %v521, 0
        %v549 = vsel %vm477, %v522, 0
        %551 = vmatpush.msra.mxu0 0.0
        %552 = vmatpush.msra.mxu0 0.0
        %553 = vmatpush.msra.mxu0 0.0
        %554 = vmatpush.msra.mxu0 0.0
        %555 = vmatpush.msra.mxu0 0.0
        %556 = vmatpush.msra.mxu0 0.0
        %557 = vmatpush.msra.mxu0 0.0
        %558 = vmatpush.msra.mxu0 0.0
        %559 = vmatpush.msra.mxu0 %v534
        %560 = vmatpush.msra.mxu0 %v533
        %561 = vmatpush.msra.mxu0 %v532
        %562 = vmatpush.msra.mxu0 %v531
        %563 = vmatpush.msra.mxu0 %v530
        %564 = vmatpush.msra.mxu0 %v529
        %565 = vmatpush.msra.mxu0 %v528
        %566 = vmatpush.msra.mxu0 %v527
        %567 = vmatmul.f32.gmra.mxu0 %v540
        %v568 = vpop.f32.mrf.mxu0
        %v569 = vadd.f32 %v537, %v568
        %570 = vmatmul.f32.gmra.mxu0 %v543
        %v571 = vpop.f32.mrf.mxu0
        %v572 = vadd.f32 %v537, %v571
        %573 = vmatmul.f32.gmra.mxu0 %v546
        %v574 = vpop.f32.mrf.mxu0
        %v575 = vadd.f32 %v537, %v574
        %576 = vmatmul.f32.gmra.mxu0 %v549
        %v577 = vpop.f32.mrf.mxu0
        %v578 = vadd.f32 %v537, %v577
        %579 = vdwg.mxu0
        %584 = vrot.lane.b32.xlu0 %v569, 64
        %v585 = vpop.permute.xlu0 %584
        %586 = vrot.lane.b32.xlu0 %v572, 64
        %v587 = vpop.permute.xlu0 %586
        %588 = vrot.lane.b32.xlu0 %v575, 64
        %v589 = vpop.permute.xlu0 %588
        %590 = vrot.lane.b32.xlu0 %v578, 64
        %v591 = vpop.permute.xlu0 %590
        %vm596 = vcmask 1048064
        %597 = vst.msk [vmem:[%s391] sm:$0xff] %vm596, %v585
        %598 = vst.msk [vmem:[%s391 + $0x8] sm:$0xff] %vm596, %v587
        %599 = vst.msk [vmem:[%s391 + $0x10] sm:$0xff] %vm596, %v589
        %600 = vst.msk [vmem:[%s391 + $0x18] sm:$0xff] %vm596, %v591
        %v601 = vld [vmem:[#allocation5] sm:$0xff]
        %v602 = vld [vmem:[#allocation5 + $0x8] sm:$0xff]
        %v603 = vld [vmem:[#allocation5 + $0x10] sm:$0xff]
        %v604 = vld [vmem:[#allocation5 + $0x18] sm:$0xff]
        %v605 = vld [vmem:[#allocation5 + $0x20] sm:$0xff]
        %v606 = vld [vmem:[#allocation5 + $0x28] sm:$0xff]
        %v607 = vld [vmem:[#allocation5 + $0x30] sm:$0xff]
        %v608 = vld [vmem:[#allocation5 + $0x38] sm:$0xff]
        %v609 = vld [vmem:[%s8] sm:$0x1]
        %v611 = vperm.slane %v609, 0
        %613 = vmatpush.msra.mxu0 0.0
        %614 = vmatpush.msra.mxu0 0.0
        %615 = vmatpush.msra.mxu0 0.0
        %616 = vmatpush.msra.mxu0 0.0
        %617 = vmatpush.msra.mxu0 0.0
        %618 = vmatpush.msra.mxu0 0.0
        %619 = vmatpush.msra.mxu0 0.0
        %620 = vmatpush.msra.mxu0 0.0
        %621 = vmatpush.msra.mxu0 %v608
        %622 = vmatpush.msra.mxu0 %v607
        %623 = vmatpush.msra.mxu0 %v606
        %624 = vmatpush.msra.mxu0 %v605
        %625 = vmatpush.msra.mxu0 %v604
        %626 = vmatpush.msra.mxu0 %v603
        %627 = vmatpush.msra.mxu0 %v602
        %628 = vmatpush.msra.mxu0 %v601
        %629 = vmatmul.f32.gmra.mxu0 %v540
        %v630 = vpop.f32.mrf.mxu0
        %v631 = vadd.f32 %v611, %v630
        %632 = vmatmul.f32.gmra.mxu0 %v543
        %v633 = vpop.f32.mrf.mxu0
        %v634 = vadd.f32 %v611, %v633
        %635 = vmatmul.f32.gmra.mxu0 %v546
        %v636 = vpop.f32.mrf.mxu0
        %v637 = vadd.f32 %v611, %v636
        %638 = vmatmul.f32.gmra.mxu0 %v549
        %v639 = vpop.f32.mrf.mxu0
        %v640 = vadd.f32 %v611, %v639
        %641 = vdwg.mxu0
        %v642 = vpack.c.bf16 %v631, %v631
        %v643 = vpack.c.bf16 %v634, %v634
        %v644 = vpack.c.bf16 %v637, %v637
        %v645 = vpack.c.bf16 %v640, %v640
        %646 = vst [vmem:[%s398] sm:$0xf] %v642
        %647 = vst [vmem:[%s398 + $0x4] sm:$0xf] %v643
        %648 = vst [vmem:[%s398 + $0x8] sm:$0xf] %v644
        %649 = vst [vmem:[%s398 + $0xc] sm:$0xf] %v645
        %s650 = sand.u32 %s232, 1
        %s651 = scalar_lea.sflag [#allocation4], %s650
        %s652 = sand.u32 %s232, 1
        %s653 = smul.addr %s652, 32
        %s654 = scalar_lea.vmem [#allocation7], %s653
        %s655 = sand.u32 %s258, 1
        %s656 = scalar_lea.sflag [#allocation9], %s655
        %s657 = sand.u32 %s258, 1
        %s658 = smul.addr %s657, 16
        %s659 = scalar_lea.vmem [#allocation8], %s658
        // Predicated region
        $region65: #{tpu_custom_call.1} parent=55 // pred_check
          %p660 = pneg %p242
        $region66: #{tpu_custom_call.1} parent=55 // pred_check_branch
          %662 = sbr.rel (%p660) target = $region68
        $region67: #{tpu_custom_call.1} parent=55 // pred_region
          %s663 = smul.u32 4, %s30
          %665 = vsyncadd %s651, 0
          %s666 = smul.addr %s663, 8
          %s667 = scalar_lea.hbm %s9, %s666
          %s668 = sshll.u32 %s654, 4
          %s669 = int_to_ptr.vmem [resolvable:$true] %s668
          %s670 = sshll.u32 %s667, 4
          %s671 = int_to_ptr.hbm [resolvable:$true] %s670
          %676 = dma.vmem_to_hbm [thread:$0]  %s669, 512, %s671, %s651, 128, 128, 8
        $region68: #{tpu_custom_call.1} parent=55 // pred_fallthru
          _
        // Predicated region
        $region69: #{tpu_custom_call.1} parent=55 // pred_check
          %p677 = pneg %p268
        $region70: #{tpu_custom_call.1} parent=55 // pred_check_branch
          %679 = sbr.rel (%p677) target = $region72
        $region71: #{tpu_custom_call.1} parent=55 // pred_region
          %s680 = smul.u32 4, %s30
          %682 = vsyncadd %s656, 0
          %s683 = smul.addr %s680, 4
          %s684 = scalar_lea.hbm %s10, %s683
          %s685 = sshll.u32 %s659, 4
          %s686 = int_to_ptr.vmem [resolvable:$true] %s685
          %s687 = sshll.u32 %s684, 4
          %s688 = int_to_ptr.hbm [resolvable:$true] %s687
          %693 = dma.vmem_to_hbm [thread:$0]  %s686, 256, %s688, %s656, 64, 64, 4
        $region72: #{tpu_custom_call.1} parent=55 // pred_fallthru
          _
      $region56: #{tpu_custom_call.1} parent=5 // pred_fallthru
        _
      %p694 = scmp.le.s32.totalorder 2, %s25
      // Predicated region
      $region73: #{tpu_custom_call.1} parent=5 // pred_check
        %p695 = pneg %p694
      $region74: #{tpu_custom_call.1} parent=5 // pred_check_branch
        %697 = sbr.rel (%p695) target = $region76
      $region75: #{tpu_custom_call.1} parent=5 // pred_region
        %s698 = ssub.s32 %s25, 2
        // Predicated region
        $region77: #{tpu_custom_call.1} parent=75 // pred_check
          %p699 = pneg %p248
        $region78: #{tpu_custom_call.1} parent=75 // pred_check_branch
          %701 = sbr.rel (%p699) target = $region80
        $region79: #{tpu_custom_call.1} parent=75 // pred_region
          %s702 = sand.u32 %s233, 1
          %s703 = scalar_lea.sflag [#allocation4], %s702
          %s704 = sand.u32 %s233, 1
          %s705 = smul.addr %s704, 32
          %s706 = scalar_lea.vmem [#allocation7], %s705
          %708 = dma.done %s703, 512
        $region80: #{tpu_custom_call.1} parent=75 // pred_fallthru
          _
        // Predicated region
        $region81: #{tpu_custom_call.1} parent=75 // pred_check
          %p709 = pneg %p274
        $region82: #{tpu_custom_call.1} parent=75 // pred_check_branch
          %711 = sbr.rel (%p709) target = $region84
        $region83: #{tpu_custom_call.1} parent=75 // pred_region
          %s712 = sand.u32 %s259, 1
          %s713 = scalar_lea.sflag [#allocation9], %s712
          %s714 = sand.u32 %s259, 1
          %s715 = smul.addr %s714, 16
          %s716 = scalar_lea.vmem [#allocation8], %s715
          %718 = dma.done %s713, 256
        $region84: #{tpu_custom_call.1} parent=75 // pred_fallthru
          _
      $region76: #{tpu_custom_call.1} parent=5 // pred_fallthru
        _
    $region6: #{tpu_custom_call.1} parent=1 // loop_footer
      %s29 = sadd.s32 1, %s25
    $region7: #{tpu_custom_call.1} parent=1 // loop_footer_branch
      %24 = sbr.rel target = $region3
    $region8: #{tpu_custom_call.1} parent=1 // loop_exit
      _
    %719 = vsyncpa [#allocation3], 1
    %s720 = scalar_lea.sflag [#allocation3], 1
    %721 = vsyncpa %s720, 1
    %722 = vsyncpa [#allocation6], 1
    %723 = vsyncpa [#allocation4], 1
    %s724 = scalar_lea.sflag [#allocation4], 1
    %725 = vsyncpa %s724, 1
    %726 = vsyncpa [#allocation9], 1
    %s727 = scalar_lea.sflag [#allocation9], 1
    %728 = vsyncpa %s727, 1

</llo_original>
